<compile_context>
chip_gen: v7x
topology: tpu7x:2x2x1
jax: 0.10.0
libtpu: 0.0.40
codegen_flags: <defaults>
</compile_context>

<pallas_src>
import jax
import jax.numpy as jnp
from jax.experimental import pallas as pl
from jax.experimental.pallas import tpu as pltpu

STATE_DIM = 2      # MountainCarContinuous observation dim
ACTION_DIM = 1     # MountainCarContinuous action dim
HIDDEN = 256
MAX_ACTION = 1.0   # env.action_space.high[0] for MountainCarContinuous-v0
MAX_TILE_M = 1024  # cap on the batch tile (amortizes ~0.35 us per grid step)


def _round_up(n, m):
    return ((n + m - 1) // m) * m


def actor_kernel(x_ref, w1_ref, b1_ref, w2_ref, b2_ref, w3t_ref, b3_ref, o_ref):
    x = x_ref[...]                                      # (tm, STATE_DIM) f32

    # ---- fc1 + ReLU on the VPU (K=2 would waste a full MXU push) ----
    h1 = x[:, 0:1] * w1_ref[0:1, :]                     # (tm, HIDDEN)
    for k in range(1, STATE_DIM):                       # unrolled at trace time
        h1 = h1 + x[:, k:k + 1] * w1_ref[k:k + 1, :]
    h1 = jnp.maximum(h1 + b1_ref[...], 0.0)

    # ---- fc2 + ReLU: the only matmul worth the MXU (bf16 in / f32 acc) ----
    h2 = jnp.dot(h1.astype(jnp.bfloat16), w2_ref[...],
                 preferred_element_type=jnp.float32)
    h2 = jnp.maximum(h2 + b2_ref[...], 0.0)             # (tm, HIDDEN) f32

    # ---- fc3 (N=1): VPU multiply + XLU cross-lane reduce -> (tm, 1) column ----
    col = jnp.sum(h2 * w3t_ref[...], axis=-1, keepdims=True)

    # ---- lane-dense epilogue: (tm,1) column -> (1,tm) row, then tanh/store ----
    row = jnp.transpose(col) + b3_ref[0]                # (1, tm), bias from SMEM
    row = jnp.tanh(row)
    if MAX_ACTION != 1.0:                               # elide the no-op scale
        row = MAX_ACTION * row
    o_ref[...] = row.astype(o_ref.dtype)


def actor_forward(x, params):
    w1, b1, w2, b2, w3t, b3 = params
    B = x.shape[0]

    # Dominant weight goes to the MXU as bf16 (f32 accumulation in-kernel).
    w2_bf16 = w2.astype(jnp.bfloat16)

    # --- adaptive batch tile ---
    b8 = _round_up(B, 8)
    if b8 <= 512:
        # Single big tile: skip the pipelined grid entirely (RL-style batches).
        tm, n_tiles = b8, 1
    else:
        # >=2 grid steps so the "parallel" axis spans both v7x TensorCores.
        # tm is a multiple of 128 so the lane-dense (1, tm) out block is legal.
        tm = min(MAX_TILE_M, _round_up(pl.cdiv(B, 2), 128))
        n_tiles = pl.cdiv(B, tm)
    Bp = n_tiles * tm
    if Bp != B:
        x = jnp.pad(x, ((0, Bp - B), (0, 0)))

    out = pl.pallas_call(
        actor_kernel,
        out_shape=jax.ShapeDtypeStruct((1, Bp), jnp.float32),
        grid=(n_tiles,),
        in_specs=[
            # activations: tiled over the batch
            pl.BlockSpec((tm, STATE_DIM), lambda i: (i, 0)),
            # weights / biases: constant block index -> stay VMEM-resident
            pl.BlockSpec((STATE_DIM, HIDDEN), lambda i: (0, 0)),
            pl.BlockSpec((1, HIDDEN), lambda i: (0, 0)),
            pl.BlockSpec((HIDDEN, HIDDEN), lambda i: (0, 0)),   # bf16 w2
            pl.BlockSpec((1, HIDDEN), lambda i: (0, 0)),
            pl.BlockSpec((1, HIDDEN), lambda i: (0, 0)),
            # fc3 bias: single scalar in SMEM (no padded VMEM tile / DMA stream)
            pl.BlockSpec(memory_space=pltpu.MemorySpace.SMEM),
        ],
        # lane-dense output: batch along lanes, one (1, tm) row per grid step
        out_specs=pl.BlockSpec((1, tm), lambda i: (0, i)),
        compiler_params=pltpu.CompilerParams(
            dimension_semantics=("parallel",)),
    )(x, w1, b1, w2_bf16, b2, w3t, b3)
    return out[0, :B].reshape(B, ACTION_DIM)


def init_params(key):
    """Deterministic init mimicking PyTorch Linear default (U[-1/sqrt(fan_in), +])."""
    ks = jax.random.split(key, 6)

    def uni(k, shape, fan_in):
        bound = 1.0 / jnp.sqrt(float(fan_in))
        return jax.random.uniform(k, shape, jnp.float32, -bound, bound)

    # w1/w2 stored as (in, out) == PyTorch weight.T; w3 kept in PyTorch (out, in)
    # layout (1, 256) since the kernel consumes it as a row for the lane reduce.
    w1 = uni(ks[0], (STATE_DIM, HIDDEN), STATE_DIM)
    b1 = uni(ks[1], (1, HIDDEN), STATE_DIM)
    w2 = uni(ks[2], (HIDDEN, HIDDEN), HIDDEN)
    b2 = uni(ks[3], (1, HIDDEN), HIDDEN)
    w3t = uni(ks[4], (1, HIDDEN), HIDDEN)          # == PyTorch fc3.weight
    b3 = uni(ks[5], (1,), HIDDEN)                  # scalar bias, lives in SMEM
    return (w1, b1, w2, b2, w3t, b3)


def actor_ref(x, params, *, match_kernel_precision=False):
    """Pure-JAX reference of the PyTorch forward, for correctness checking."""
    w1, b1, w2, b2, w3t, b3 = params
    hp = jax.lax.Precision.HIGHEST
    h = jnp.maximum(jnp.dot(x, w1, precision=hp) + b1, 0.0)
    if match_kernel_precision:
        h2 = jnp.dot(h.astype(jnp.bfloat16), w2.astype(jnp.bfloat16),
                     preferred_element_type=jnp.float32)
    else:
        h2 = jnp.dot(h, w2, precision=hp)
    h2 = jnp.maximum(h2 + b2, 0.0)
    return MAX_ACTION * jnp.tanh(jnp.dot(h2, w3t.T, precision=hp) + b3)


if __name__ == "__main__":
    key = jax.random.PRNGKey(0)
    k_param, k_x1, k_x2 = jax.random.split(key, 3)
    params = init_params(k_param)

    # Small batch (non-multiple of 8 -> exercises padding + the single-tile
    # path), plus a larger batch exercising the 2-tile "parallel" path.
    for k_x, B in ((k_x1, 37), (k_x2, 1280)):
        x = jax.random.normal(k_x, (B, STATE_DIM), jnp.float32)

        out = jax.block_until_ready(actor_forward(x, params))
        assert out.shape == (B, ACTION_DIM)

        # Tight check against a reference using the kernel's bf16 fc2 precision.
        ref_bf16 = actor_ref(x, params, match_kernel_precision=True)
        assert jnp.allclose(out, ref_bf16, atol=1e-3, rtol=1e-3), (
            float(jnp.max(jnp.abs(out - ref_bf16))))

        # Loose check against the full-f32 PyTorch-style forward
        # (tolerance relaxed for the bf16 fc2, per the review).
        ref_f32 = actor_ref(x, params)
        assert jnp.allclose(out, ref_f32, atol=2e-2, rtol=2e-2), (
            float(jnp.max(jnp.abs(out - ref_f32))))

    print("KERNEL_OK")
</pallas_src>

<mosaic_0001>
module attributes {stable_mosaic.version = 11 : i64} {
  func.func @actor_kernel(%arg0: i32, %arg1: memref<40x2xf32, #tpu.memory_space<vmem>>, %arg2: memref<2x256xf32, #tpu.memory_space<vmem>>, %arg3: memref<1x256xf32, #tpu.memory_space<vmem>>, %arg4: memref<256x256xbf16, #tpu.memory_space<vmem>>, %arg5: memref<1x256xf32, #tpu.memory_space<vmem>>, %arg6: memref<1x256xf32, #tpu.memory_space<vmem>>, %arg7: memref<1xf32, #tpu.memory_space<smem>>, %arg8: memref<1x40xf32, #tpu.memory_space<vmem>>) attributes {dimension_semantics = [#tpu.dimension_semantics<parallel>], iteration_bounds = array<i64: 1>, scalar_prefetch = 0 : i64, scratch_operands = 0 : i64, tpu.core_type = #tpu.core_type<tc>, window_params = [{transform_indices = @transform_0, window_bounds = array<i64: 40, 2>}, {pipeline_mode = #tpu.pipeline_mode<synchronous>, transform_indices = @transform_1, window_bounds = array<i64: 2, 256>}, {pipeline_mode = #tpu.pipeline_mode<synchronous>, transform_indices = @transform_2, window_bounds = array<i64: 1, 256>}, {pipeline_mode = #tpu.pipeline_mode<synchronous>, transform_indices = @transform_3, window_bounds = array<i64: 256, 256>}, {pipeline_mode = #tpu.pipeline_mode<synchronous>, transform_indices = @transform_4, window_bounds = array<i64: 1, 256>}, {pipeline_mode = #tpu.pipeline_mode<synchronous>, transform_indices = @transform_5, window_bounds = array<i64: 1, 256>}, {transform_indices = @transform_6, window_bounds = array<i64: 1>}, {transform_indices = @transform_7, window_bounds = array<i64: 1, 40>}]} {
    %c0 = arith.constant 0 : index
    %c0_0 = arith.constant 0 : index
    %0 = vector.load %arg1[%c0, %c0_0] : memref<40x2xf32, #tpu.memory_space<vmem>>, vector<40x2xf32>
    %1 = vector.extract_strided_slice %0 {offsets = [0, 0], sizes = [40, 1], strides = [1, 1]} : vector<40x2xf32> to vector<40x1xf32>
    %c0_1 = arith.constant 0 : index
    %c0_2 = arith.constant 0 : index
    %2 = vector.load %arg2[%c0_1, %c0_2] : memref<2x256xf32, #tpu.memory_space<vmem>>, vector<1x256xf32>
    %3 = vector.broadcast %1 : vector<40x1xf32> to vector<40x256xf32>
    %4 = vector.broadcast %2 : vector<1x256xf32> to vector<40x256xf32>
    %5 = arith.mulf %3, %4 : vector<40x256xf32>
    %6 = vector.extract_strided_slice %0 {offsets = [0, 1], sizes = [40, 1], strides = [1, 1]} : vector<40x2xf32> to vector<40x1xf32>
    %c1 = arith.constant 1 : index
    %c0_3 = arith.constant 0 : index
    %7 = vector.load %arg2[%c1, %c0_3] : memref<2x256xf32, #tpu.memory_space<vmem>>, vector<1x256xf32>
    %8 = vector.broadcast %6 : vector<40x1xf32> to vector<40x256xf32>
    %9 = vector.broadcast %7 : vector<1x256xf32> to vector<40x256xf32>
    %10 = arith.mulf %8, %9 : vector<40x256xf32>
    %11 = arith.addf %5, %10 : vector<40x256xf32>
    %c0_4 = arith.constant 0 : index
    %c0_5 = arith.constant 0 : index
    %12 = vector.load %arg3[%c0_4, %c0_5] : memref<1x256xf32, #tpu.memory_space<vmem>>, vector<1x256xf32>
    %13 = vector.broadcast %12 : vector<1x256xf32> to vector<40x256xf32>
    %14 = arith.addf %11, %13 : vector<40x256xf32>
    %cst = arith.constant 0.000000e+00 : f32
    %15 = vector.broadcast %cst : f32 to vector<40x256xf32>
    %16 = arith.maximumf %14, %15 : vector<40x256xf32>
    %17 = arith.truncf %16 : vector<40x256xf32> to vector<40x256xbf16>
    %c0_6 = arith.constant 0 : index
    %c0_7 = arith.constant 0 : index
    %18 = vector.load %arg4[%c0_6, %c0_7] : memref<256x256xbf16, #tpu.memory_space<vmem>>, vector<256x256xbf16>
    %cst_8 = arith.constant dense<0.000000e+00> : vector<40x256xf32>
    %19 = tpu.matmul %17, %18, %cst_8 {dimension_numbers = #tpu.dot_dimension_numbers<[1], [0], [0], [1], [0, 0, 1, 1], [], []>} : vector<40x256xbf16>, vector<256x256xbf16>, vector<40x256xf32> -> vector<40x256xf32>
    %c0_9 = arith.constant 0 : index
    %c0_10 = arith.constant 0 : index
    %20 = vector.load %arg5[%c0_9, %c0_10] : memref<1x256xf32, #tpu.memory_space<vmem>>, vector<1x256xf32>
    %21 = vector.broadcast %20 : vector<1x256xf32> to vector<40x256xf32>
    %22 = arith.addf %19, %21 : vector<40x256xf32>
    %cst_11 = arith.constant 0.000000e+00 : f32
    %23 = vector.broadcast %cst_11 : f32 to vector<40x256xf32>
    %24 = arith.maximumf %22, %23 : vector<40x256xf32>
    %c0_12 = arith.constant 0 : index
    %c0_13 = arith.constant 0 : index
    %25 = vector.load %arg6[%c0_12, %c0_13] : memref<1x256xf32, #tpu.memory_space<vmem>>, vector<1x256xf32>
    %26 = vector.broadcast %25 : vector<1x256xf32> to vector<40x256xf32>
    %27 = arith.mulf %24, %26 : vector<40x256xf32>
    %cst_14 = arith.constant dense<0.000000e+00> : vector<40xf32>
    %28 = vector.multi_reduction <add>, %27, %cst_14 [1] : vector<40x256xf32> to vector<40xf32>
    %29 = vector.shape_cast %28 : vector<40xf32> to vector<40x1xf32>
    %30 = tpu.transpose %29, [1, 0] : vector<40x1xf32> -> vector<1x40xf32>
    %c0_15 = arith.constant 0 : index
    %31 = memref.load %arg7[%c0_15] : memref<1xf32, #tpu.memory_space<smem>>
    %32 = vector.broadcast %31 : f32 to vector<1x40xf32>
    %33 = arith.addf %30, %32 : vector<1x40xf32>
    %34 = math.tanh %33 : vector<1x40xf32>
    %c0_16 = arith.constant 0 : index
    %c0_17 = arith.constant 0 : index
    %35 = vector.load %arg8[%c0_16, %c0_17] : memref<1x40xf32, #tpu.memory_space<vmem>>, vector<1x40xf32>
    tpu.vector_store %arg8[%c0_16, %c0_17], %34 {strides = array<i32>} : memref<1x40xf32, #tpu.memory_space<vmem>>, vector<1x40xf32>,
    return
  }
  func.func @transform_0(%arg0: i32) -> (i32, i32) {
    %c0_i32 = arith.constant 0 : i32
    %c0_i32_0 = arith.constant 0 : i32
    return %arg0, %c0_i32 : i32, i32
  }
  func.func @transform_1(%arg0: i32) -> (i32, i32) {
    %c0_i32 = arith.constant 0 : i32
    %c0_i32_0 = arith.constant 0 : i32
    %c0_i32_1 = arith.constant 0 : i32
    return %c0_i32, %c0_i32_0 : i32, i32
  }
  func.func @transform_2(%arg0: i32) -> (i32, i32) {
    %c0_i32 = arith.constant 0 : i32
    %c0_i32_0 = arith.constant 0 : i32
    %c0_i32_1 = arith.constant 0 : i32
    return %c0_i32, %c0_i32_0 : i32, i32
  }
  func.func @transform_3(%arg0: i32) -> (i32, i32) {
    %c0_i32 = arith.constant 0 : i32
    %c0_i32_0 = arith.constant 0 : i32
    %c0_i32_1 = arith.constant 0 : i32
    return %c0_i32, %c0_i32_0 : i32, i32
  }
  func.func @transform_4(%arg0: i32) -> (i32, i32) {
    %c0_i32 = arith.constant 0 : i32
    %c0_i32_0 = arith.constant 0 : i32
    %c0_i32_1 = arith.constant 0 : i32
    return %c0_i32, %c0_i32_0 : i32, i32
  }
  func.func @transform_5(%arg0: i32) -> (i32, i32) {
    %c0_i32 = arith.constant 0 : i32
    %c0_i32_0 = arith.constant 0 : i32
    %c0_i32_1 = arith.constant 0 : i32
    return %c0_i32, %c0_i32_0 : i32, i32
  }
  func.func @transform_6(%arg0: i32) -> i32 {
    %c0_i32 = arith.constant 0 : i32
    %c0_i32_0 = arith.constant 0 : i32
    return %c0_i32 : i32
  }
  func.func @transform_7(%arg0: i32) -> (i32, i32) {
    %c0_i32 = arith.constant 0 : i32
    %c0_i32_0 = arith.constant 0 : i32
    return %c0_i32, %arg0 : i32, i32
  }
}

</mosaic_0001>

<llo_original>
// kernel: tpu_custom_call.1
$region0: #{tpu_custom_call.1}
  #allocation0 [shape = 'u32[]', space=smem, size = 0x4, offset = 0x4, fixed_abs, tag = 'smem constant byte address 0x4 - core index']
  #allocation1 [shape = 'u32[144,128]{1,0:T(1,128)}', space=vmem, size = 0x12000, scoped, tag = 'internal scratch']
  #allocation2 [shape = 'f32[1]{0:T(128)S(6)}', space=smem, size = 0x200, scoped, tag = 'scoped memory for tpu_custom_call.1']
  %s0 = inlined_call_operand.vmem [shape: f32[40,2], index: 0, kind: input, shape index: {}]
  %s1 = inlined_call_operand.vmem [shape: f32[2,256], index: 1, kind: input, shape index: {}]
  %s2 = inlined_call_operand.vmem [shape: f32[1,256], index: 2, kind: input, shape index: {}]
  %s3 = inlined_call_operand.hbm [shape: bf16[256,256], index: 3, kind: input, shape index: {}]
  %s4 = inlined_call_operand.vmem [shape: f32[1,256], index: 4, kind: input, shape index: {}]
  %s5 = inlined_call_operand.vmem [shape: f32[1,256], index: 5, kind: input, shape index: {}]
  %s6 = inlined_call_operand.<no memory space> [shape: f32[1], index: 6, kind: input, shape index: {}]
  %s7 = inlined_call_operand.hbm [shape: f32[1,40], index: 7, kind: output, shape index: {}]
  %s8 = sld [smem:[#allocation0]]
  $region42: #{tpu_custom_call.1} parent=0
    _
  %s10 = ssub.s32 1, %s8
  %s11 = scalar_select 0, %s10, %s8
  %12 = sst [smem:[#allocation2]] %s6
  $region1: #{tpu_custom_call.1} parent=0
    #allocation3 [shape = 'u8[131072]{0}', space=vmem, size = 0x20000, scoped, tag = 'input window, operand 3, single buffered']
    #allocation4 [shape = 's32[1]{0}', space=sflag, size = 0x4, scoped, tag = 'scoped memory for tpu_custom_call.1']
    #allocation5 [shape = 's32[1]{0}', space=sflag, size = 0x4, scoped, tag = 'scoped memory for tpu_custom_call.1']
    #allocation6 [shape = 'u8[512]{0}', space=vmem, size = 0x400, scoped, tag = 'output window, operand 0, single buffered']
    %13 = vsyncpa [#allocation4], 0
    %14 = vsyncpa [#allocation5], 0
    // Predicated region
    $region2: #{tpu_custom_call.1} parent=1 // pred_check
      _
    $region3: #{tpu_custom_call.1} parent=1 // pred_check_branch
      %16 = sbr.rel (0) target = $region5
    $region4: #{tpu_custom_call.1} parent=1 // pred_region
      _
    $region5: #{tpu_custom_call.1} parent=1 // pred_fallthru
      _
    // Predicated region
    $region6: #{tpu_custom_call.1} parent=1 // pred_check
      _
    $region7: #{tpu_custom_call.1} parent=1 // pred_check_branch
      %18 = sbr.rel (0) target = $region9
    $region8: #{tpu_custom_call.1} parent=1 // pred_region
      _
    $region9: #{tpu_custom_call.1} parent=1 // pred_fallthru
      _
    // Predicated region
    $region10: #{tpu_custom_call.1} parent=1 // pred_check
      _
    $region11: #{tpu_custom_call.1} parent=1 // pred_check_branch
      %20 = sbr.rel (0) target = $region13
    $region12: #{tpu_custom_call.1} parent=1 // pred_region
      _
    $region13: #{tpu_custom_call.1} parent=1 // pred_fallthru
      _
    // Predicated region
    $region14: #{tpu_custom_call.1} parent=1 // pred_check
      _
    $region15: #{tpu_custom_call.1} parent=1 // pred_check_branch
      %22 = sbr.rel (0) target = $region17
    $region16: #{tpu_custom_call.1} parent=1 // pred_region
      %s24 = ssub.s32 4096, 4096
      %25 = vsyncadd [#allocation4], %s24
      %s26 = sshll.u32 [#allocation3], 4
      %s27 = int_to_ptr.vmem [resolvable:$true] %s26
      %32 = dma.hbm_to_vmem [thread:$0]  %s3, 4096, %s27, [#allocation4], 128, 128, 8
    $region17: #{tpu_custom_call.1} parent=1 // pred_fallthru
      _
    // Predicated region
    $region18: #{tpu_custom_call.1} parent=1 // pred_check
      _
    $region19: #{tpu_custom_call.1} parent=1 // pred_check_branch
      %34 = sbr.rel (0) target = $region21
    $region20: #{tpu_custom_call.1} parent=1 // pred_region
      _
    $region21: #{tpu_custom_call.1} parent=1 // pred_fallthru
      _
    // Predicated region
    $region22: #{tpu_custom_call.1} parent=1 // pred_check
      _
    $region23: #{tpu_custom_call.1} parent=1 // pred_check_branch
      %36 = sbr.rel (0) target = $region25
    $region24: #{tpu_custom_call.1} parent=1 // pred_region
      _
    $region25: #{tpu_custom_call.1} parent=1 // pred_fallthru
      _
    // Predicated region
    $region26: #{tpu_custom_call.1} parent=1 // pred_check
      _
    $region27: #{tpu_custom_call.1} parent=1 // pred_check_branch
      %38 = sbr.rel (0) target = $region29
    $region28: #{tpu_custom_call.1} parent=1 // pred_region
      _
    $region29: #{tpu_custom_call.1} parent=1 // pred_fallthru
      _
    // Predicated region
    $region30: #{tpu_custom_call.1} parent=1 // pred_check
      _
    $region31: #{tpu_custom_call.1} parent=1 // pred_check_branch
      %40 = sbr.rel (0) target = $region33
    $region32: #{tpu_custom_call.1} parent=1 // pred_region
      %41 = dma.done [#allocation4], 4096
    $region33: #{tpu_custom_call.1} parent=1 // pred_fallthru
      _
    %v42 = vld [vmem:[%s0] sm:$0xff]
    %v43 = vld [vmem:[%s0 + $0x8] sm:$0xff]
    %v44 = vld [vmem:[%s0 + $0x10] sm:$0xff]
    %v45 = vld [vmem:[%s0 + $0x18] sm:$0xff]
    %v46 = vld [vmem:[%s0 + $0x20] sm:$0xff]
    %v47 = vld [vmem:[%s1] ss:$2 sm:$0x3]
    %49 = vset.pattern.permute.xlu0 0
    %50 = vperm.xlu0 %49, %v42
    %v51 = vpop.permute.xlu0 %50
    %54 = vset.pattern.permute.xlu0 0
    %55 = vperm.xlu0 %54, %v43
    %v56 = vpop.permute.xlu0 %55
    %59 = vset.pattern.permute.xlu0 0
    %60 = vperm.xlu0 %59, %v44
    %v61 = vpop.permute.xlu0 %60
    %64 = vset.pattern.permute.xlu0 0
    %65 = vperm.xlu0 %64, %v45
    %v66 = vpop.permute.xlu0 %65
    %69 = vset.pattern.permute.xlu0 0
    %70 = vperm.xlu0 %69, %v46
    %v71 = vpop.permute.xlu0 %70
    %v74 = vlaneseq
    %v75 = vshrl.u32 %v74, 7
    %v76 = vsub.s32 0, %v75
    %v77 = vrot.slane %v47, %v76
    %v78 = vlaneseq
    %v79 = vshrl.u32 %v78, 7
    %v80 = vsub.s32 1, %v79
    %v81 = vrot.slane %v47, %v80
    %v84 = vmul.f32 %v51, %v77
    %v85 = vmul.f32 %v51, %v81
    %v86 = vmul.f32 %v56, %v77
    %v87 = vmul.f32 %v56, %v81
    %v88 = vmul.f32 %v61, %v77
    %v89 = vmul.f32 %v61, %v81
    %v90 = vmul.f32 %v66, %v77
    %v91 = vmul.f32 %v66, %v81
    %v92 = vmul.f32 %v71, %v77
    %v93 = vmul.f32 %v71, %v81
    %s94 = scalar_lea.vmem %s1, 1
    %v95 = vld [vmem:[%s94] ss:$2 sm:$0x3]
    %96 = vset.pattern.permute.xlu0 1
    %97 = vperm.xlu0 %96, %v42
    %v98 = vpop.permute.xlu0 %97
    %100 = vset.pattern.permute.xlu0 1
    %101 = vperm.xlu0 %100, %v43
    %v102 = vpop.permute.xlu0 %101
    %104 = vset.pattern.permute.xlu0 1
    %105 = vperm.xlu0 %104, %v44
    %v106 = vpop.permute.xlu0 %105
    %108 = vset.pattern.permute.xlu0 1
    %109 = vperm.xlu0 %108, %v45
    %v110 = vpop.permute.xlu0 %109
    %112 = vset.pattern.permute.xlu0 1
    %113 = vperm.xlu0 %112, %v46
    %v114 = vpop.permute.xlu0 %113
    %v117 = vlaneseq
    %v118 = vshrl.u32 %v117, 7
    %v119 = vsub.s32 0, %v118
    %v120 = vrot.slane %v95, %v119
    %v121 = vlaneseq
    %v122 = vshrl.u32 %v121, 7
    %v123 = vsub.s32 1, %v122
    %v124 = vrot.slane %v95, %v123
    %v127 = vmul.f32 %v98, %v120
    %v128 = vmul.f32 %v98, %v124
    %v129 = vmul.f32 %v102, %v120
    %v130 = vmul.f32 %v102, %v124
    %v131 = vmul.f32 %v106, %v120
    %v132 = vmul.f32 %v106, %v124
    %v133 = vmul.f32 %v110, %v120
    %v134 = vmul.f32 %v110, %v124
    %v135 = vmul.f32 %v114, %v120
    %v136 = vmul.f32 %v114, %v124
    %v137 = vadd.f32 %v84, %v127
    %v138 = vadd.f32 %v85, %v128
    %v139 = vadd.f32 %v86, %v129
    %v140 = vadd.f32 %v87, %v130
    %v141 = vadd.f32 %v88, %v131
    %v142 = vadd.f32 %v89, %v132
    %v143 = vadd.f32 %v90, %v133
    %v144 = vadd.f32 %v91, %v134
    %v145 = vadd.f32 %v92, %v135
    %v146 = vadd.f32 %v93, %v136
    %v147 = vld [vmem:[%s2] sm:$0x3]
    %v149 = vlaneseq
    %v150 = vshrl.u32 %v149, 7
    %v151 = vsub.s32 0, %v150
    %v152 = vrot.slane %v147, %v151
    %v153 = vlaneseq
    %v154 = vshrl.u32 %v153, 7
    %v155 = vsub.s32 1, %v154
    %v156 = vrot.slane %v147, %v155
    %v159 = vadd.f32 %v137, %v152
    %v160 = vadd.f32 %v138, %v156
    %v161 = vadd.f32 %v139, %v152
    %v162 = vadd.f32 %v140, %v156
    %v163 = vadd.f32 %v141, %v152
    %v164 = vadd.f32 %v142, %v156
    %v165 = vadd.f32 %v143, %v152
    %v166 = vadd.f32 %v144, %v156
    %v167 = vadd.f32 %v145, %v152
    %v168 = vadd.f32 %v146, %v156
    %v169 = vmax.f32 %v159, 0.0
    %v170 = vmax.f32 %v160, 0.0
    %v171 = vmax.f32 %v161, 0.0
    %v172 = vmax.f32 %v162, 0.0
    %v173 = vmax.f32 %v163, 0.0
    %v174 = vmax.f32 %v164, 0.0
    %v175 = vmax.f32 %v165, 0.0
    %v176 = vmax.f32 %v166, 0.0
    %v177 = vmax.f32 %v167, 0.0
    %v178 = vmax.f32 %v168, 0.0
    %v179 = vpack.c.bf16 %v171, %v169
    %v180 = vpack.c.bf16 %v172, %v170
    %v181 = vpack.c.bf16 %v175, %v173
    %v182 = vpack.c.bf16 %v176, %v174
    %v183 = vpack.c.bf16 %v177, %v177
    %v184 = vpack.c.bf16 %v178, %v178
    %v185 = vld [vmem:[#allocation3] sm:$0xff]
    %v186 = vld [vmem:[#allocation3 + $0x8] sm:$0xff]
    %v187 = vld [vmem:[#allocation3 + $0x10] sm:$0xff]
    %v188 = vld [vmem:[#allocation3 + $0x18] sm:$0xff]
    %v189 = vld [vmem:[#allocation3 + $0x20] sm:$0xff]
    %v190 = vld [vmem:[#allocation3 + $0x28] sm:$0xff]
    %v191 = vld [vmem:[#allocation3 + $0x30] sm:$0xff]
    %v192 = vld [vmem:[#allocation3 + $0x38] sm:$0xff]
    %v193 = vld [vmem:[#allocation3 + $0x40] sm:$0xff]
    %v194 = vld [vmem:[#allocation3 + $0x48] sm:$0xff]
    %v195 = vld [vmem:[#allocation3 + $0x50] sm:$0xff]
    %v196 = vld [vmem:[#allocation3 + $0x58] sm:$0xff]
    %v197 = vld [vmem:[#allocation3 + $0x60] sm:$0xff]
    %v198 = vld [vmem:[#allocation3 + $0x68] sm:$0xff]
    %v199 = vld [vmem:[#allocation3 + $0x70] sm:$0xff]
    %v200 = vld [vmem:[#allocation3 + $0x78] sm:$0xff]
    %v201 = vld [vmem:[#allocation3 + $0x80] sm:$0xff]
    %v202 = vld [vmem:[#allocation3 + $0x88] sm:$0xff]
    %v203 = vld [vmem:[#allocation3 + $0x90] sm:$0xff]
    %v204 = vld [vmem:[#allocation3 + $0x98] sm:$0xff]
    %v205 = vld [vmem:[#allocation3 + $0xa0] sm:$0xff]
    %v206 = vld [vmem:[#allocation3 + $0xa8] sm:$0xff]
    %v207 = vld [vmem:[#allocation3 + $0xb0] sm:$0xff]
    %v208 = vld [vmem:[#allocation3 + $0xb8] sm:$0xff]
    %v209 = vld [vmem:[#allocation3 + $0xc0] sm:$0xff]
    %v210 = vld [vmem:[#allocation3 + $0xc8] sm:$0xff]
    %v211 = vld [vmem:[#allocation3 + $0xd0] sm:$0xff]
    %v212 = vld [vmem:[#allocation3 + $0xd8] sm:$0xff]
    %v213 = vld [vmem:[#allocation3 + $0xe0] sm:$0xff]
    %v214 = vld [vmem:[#allocation3 + $0xe8] sm:$0xff]
    %v215 = vld [vmem:[#allocation3 + $0xf0] sm:$0xff]
    %v216 = vld [vmem:[#allocation3 + $0xf8] sm:$0xff]
    %v217 = vld [vmem:[%s4] sm:$0x3]
    %v219 = vlaneseq
    %v220 = vshrl.u32 %v219, 7
    %v221 = vsub.s32 0, %v220
    %v222 = vrot.slane %v217, %v221
    %v223 = vlaneseq
    %v224 = vshrl.u32 %v223, 7
    %v225 = vsub.s32 1, %v224
    %v226 = vrot.slane %v217, %v225
    %v261 = vunpack.c.l.b16 %v185
    %v262 = vunpack.c.h.b16 %v185
    %v263 = vunpack.c.l.b16 %v186
    %v264 = vunpack.c.h.b16 %v186
    %v265 = vunpack.c.l.b16 %v187
    %v266 = vunpack.c.h.b16 %v187
    %v267 = vunpack.c.l.b16 %v188
    %v268 = vunpack.c.h.b16 %v188
    %v269 = vunpack.c.l.b16 %v189
    %v270 = vunpack.c.h.b16 %v189
    %v271 = vunpack.c.l.b16 %v190
    %v272 = vunpack.c.h.b16 %v190
    %v273 = vunpack.c.l.b16 %v191
    %v274 = vunpack.c.h.b16 %v191
    %v275 = vunpack.c.l.b16 %v192
    %v276 = vunpack.c.h.b16 %v192
    %v277 = vunpack.c.l.b16 %v193
    %v278 = vunpack.c.h.b16 %v193
    %v279 = vunpack.c.l.b16 %v194
    %v280 = vunpack.c.h.b16 %v194
    %v281 = vunpack.c.l.b16 %v195
    %v282 = vunpack.c.h.b16 %v195
    %v283 = vunpack.c.l.b16 %v196
    %v284 = vunpack.c.h.b16 %v196
    %v285 = vunpack.c.l.b16 %v197
    %v286 = vunpack.c.h.b16 %v197
    %v287 = vunpack.c.l.b16 %v198
    %v288 = vunpack.c.h.b16 %v198
    %v289 = vunpack.c.l.b16 %v199
    %v290 = vunpack.c.h.b16 %v199
    %v291 = vunpack.c.l.b16 %v200
    %v292 = vunpack.c.h.b16 %v200
    %v293 = vunpack.c.l.b16 %v201
    %v294 = vunpack.c.h.b16 %v201
    %v295 = vunpack.c.l.b16 %v202
    %v296 = vunpack.c.h.b16 %v202
    %v297 = vunpack.c.l.b16 %v203
    %v298 = vunpack.c.h.b16 %v203
    %v299 = vunpack.c.l.b16 %v204
    %v300 = vunpack.c.h.b16 %v204
    %v301 = vunpack.c.l.b16 %v205
    %v302 = vunpack.c.h.b16 %v205
    %v303 = vunpack.c.l.b16 %v206
    %v304 = vunpack.c.h.b16 %v206
    %v305 = vunpack.c.l.b16 %v207
    %v306 = vunpack.c.h.b16 %v207
    %v307 = vunpack.c.l.b16 %v208
    %v308 = vunpack.c.h.b16 %v208
    %v309 = vunpack.c.l.b16 %v209
    %v310 = vunpack.c.h.b16 %v209
    %v311 = vunpack.c.l.b16 %v210
    %v312 = vunpack.c.h.b16 %v210
    %v313 = vunpack.c.l.b16 %v211
    %v314 = vunpack.c.h.b16 %v211
    %v315 = vunpack.c.l.b16 %v212
    %v316 = vunpack.c.h.b16 %v212
    %v317 = vunpack.c.l.b16 %v213
    %v318 = vunpack.c.h.b16 %v213
    %v319 = vunpack.c.l.b16 %v214
    %v320 = vunpack.c.h.b16 %v214
    %v321 = vunpack.c.l.b16 %v215
    %v322 = vunpack.c.h.b16 %v215
    %v323 = vunpack.c.l.b16 %v216
    %v324 = vunpack.c.h.b16 %v216
    %v325 = vpack.c.b16 %v263, %v261
    %v326 = vpack.c.b16 %v264, %v262
    %v327 = vpack.c.b16 %v267, %v265
    %v328 = vpack.c.b16 %v268, %v266
    %v329 = vpack.c.b16 %v271, %v269
    %v330 = vpack.c.b16 %v272, %v270
    %v331 = vpack.c.b16 %v275, %v273
    %v332 = vpack.c.b16 %v276, %v274
    %v333 = vpack.c.b16 %v279, %v277
    %v334 = vpack.c.b16 %v280, %v278
    %v335 = vpack.c.b16 %v283, %v281
    %v336 = vpack.c.b16 %v284, %v282
    %v337 = vpack.c.b16 %v287, %v285
    %v338 = vpack.c.b16 %v288, %v286
    %v339 = vpack.c.b16 %v291, %v289
    %v340 = vpack.c.b16 %v292, %v290
    %v341 = vpack.c.b16 %v295, %v293
    %v342 = vpack.c.b16 %v296, %v294
    %v343 = vpack.c.b16 %v299, %v297
    %v344 = vpack.c.b16 %v300, %v298
    %v345 = vpack.c.b16 %v303, %v301
    %v346 = vpack.c.b16 %v304, %v302
    %v347 = vpack.c.b16 %v307, %v305
    %v348 = vpack.c.b16 %v308, %v306
    %v349 = vpack.c.b16 %v311, %v309
    %v350 = vpack.c.b16 %v312, %v310
    %v351 = vpack.c.b16 %v315, %v313
    %v352 = vpack.c.b16 %v316, %v314
    %v353 = vpack.c.b16 %v319, %v317
    %v354 = vpack.c.b16 %v320, %v318
    %v355 = vpack.c.b16 %v323, %v321
    %v356 = vpack.c.b16 %v324, %v322
    %389 = vmatprep.subr.bf16.mxu0 %v326
    %390 = vmatpush1.bf16.msra.mxu0 %v325
    %391 = vmatprep.subr.bf16.mxu0 %v328
    %392 = vmatpush1.bf16.msra.mxu0 %v327
    %393 = vmatprep.subr.bf16.mxu0 %v330
    %394 = vmatpush1.bf16.msra.mxu0 %v329
    %395 = vmatprep.subr.bf16.mxu0 %v332
    %396 = vmatpush1.bf16.msra.mxu0 %v331
    %397 = vmatprep.subr.bf16.mxu0 %v334
    %398 = vmatpush1.bf16.msra.mxu0 %v333
    %399 = vmatprep.subr.bf16.mxu0 %v336
    %400 = vmatpush1.bf16.msra.mxu0 %v335
    %401 = vmatprep.subr.bf16.mxu0 %v338
    %402 = vmatpush1.bf16.msra.mxu0 %v337
    %403 = vmatprep.subr.bf16.mxu0 %v340
    %404 = vmatpush1.bf16.msra.mxu0 %v339
    %405 = vmatprep.subr.bf16.mxu0 %v342
    %406 = vmatpush1.bf16.msra.mxu0 %v341
    %407 = vmatprep.subr.bf16.mxu0 %v344
    %408 = vmatpush1.bf16.msra.mxu0 %v343
    %409 = vmatprep.subr.bf16.mxu0 %v346
    %410 = vmatpush1.bf16.msra.mxu0 %v345
    %411 = vmatprep.subr.bf16.mxu0 %v348
    %412 = vmatpush1.bf16.msra.mxu0 %v347
    %413 = vmatprep.subr.bf16.mxu0 %v350
    %414 = vmatpush1.bf16.msra.mxu0 %v349
    %415 = vmatprep.subr.bf16.mxu0 %v352
    %416 = vmatpush1.bf16.msra.mxu0 %v351
    %417 = vmatprep.subr.bf16.mxu0 %v354
    %418 = vmatpush1.bf16.msra.mxu0 %v353
    %419 = vmatprep.subr.bf16.mxu0 %v356
    %420 = vmatpush1.bf16.msra.mxu0 %v355
    %421 = vmatprep.mubr.bf16.mxu0 %v180
    %422 = vmatmul.mubr.bf16.gmra.mrb[0].mxu0 %v179
    %v423 = vpop.f32.mrb[0].mxu0
    %v424 = vadd.f32 %v222, %v423
    %v425 = vpop.f32.mrb[0].mxu0
    %v426 = vadd.f32 %v226, %v425
    %v427 = vpop.f32.mrb[0].mxu0
    %v428 = vadd.f32 %v222, %v427
    %v429 = vpop.f32.mrb[0].mxu0
    %v430 = vadd.f32 %v226, %v429
    %431 = vmatprep.mubr.bf16.mxu0 %v182
    %432 = vmatmul.mubr.bf16.gmra.mrb[0].mxu0 %v181
    %v433 = vpop.f32.mrb[0].mxu0
    %v434 = vadd.f32 %v222, %v433
    %v435 = vpop.f32.mrb[0].mxu0
    %v436 = vadd.f32 %v226, %v435
    %v437 = vpop.f32.mrb[0].mxu0
    %v438 = vadd.f32 %v222, %v437
    %v439 = vpop.f32.mrb[0].mxu0
    %v440 = vadd.f32 %v226, %v439
    %441 = vmatprep.mubr.bf16.mxu0 %v184
    %442 = vmatmul.mubr.bf16.gmra.mrb[0].mxu0 %v183
    %v443 = vpop.f32.mrb[0].mxu0
    %v444 = vadd.f32 %v222, %v443
    %v445 = vpop.f32.mrb[0].mxu0
    %v446 = vadd.f32 %v226, %v445
    %v447 = vpop.f32.mrb[0].mxu0
    %v448 = vpop.f32.mrb[0].mxu0
    %449 = vdwg.mxu0
    %v450 = vmax.f32 %v424, 0.0
    %v451 = vmax.f32 %v426, 0.0
    %v452 = vmax.f32 %v428, 0.0
    %v453 = vmax.f32 %v430, 0.0
    %v454 = vmax.f32 %v434, 0.0
    %v455 = vmax.f32 %v436, 0.0
    %v456 = vmax.f32 %v438, 0.0
    %v457 = vmax.f32 %v440, 0.0
    %v458 = vmax.f32 %v444, 0.0
    %v459 = vmax.f32 %v446, 0.0
    %v460 = vld [vmem:[%s5] sm:$0x3]
    %v462 = vlaneseq
    %v463 = vshrl.u32 %v462, 7
    %v464 = vsub.s32 0, %v463
    %v465 = vrot.slane %v460, %v464
    %v466 = vlaneseq
    %v467 = vshrl.u32 %v466, 7
    %v468 = vsub.s32 1, %v467
    %v469 = vrot.slane %v460, %v468
    %v472 = vmul.f32 %v450, %v465
    %v473 = vmul.f32 %v451, %v469
    %v474 = vmul.f32 %v452, %v465
    %v475 = vmul.f32 %v453, %v469
    %v476 = vmul.f32 %v454, %v465
    %v477 = vmul.f32 %v455, %v469
    %v478 = vmul.f32 %v456, %v465
    %v479 = vmul.f32 %v457, %v469
    %v480 = vmul.f32 %v458, %v465
    %v481 = vmul.f32 %v459, %v469
    %v482 = vadd.f32 %v472, %v473
    %483 = vadd.xlane.f32.xlu0 %v482
    %v484 = vpop.xlane.xlu0 %483
    %v485 = vadd.f32 %v474, %v475
    %486 = vadd.xlane.f32.xlu0 %v485
    %v487 = vpop.xlane.xlu0 %486
    %v488 = vadd.f32 %v476, %v477
    %489 = vadd.xlane.f32.xlu0 %v488
    %v490 = vpop.xlane.xlu0 %489
    %v491 = vadd.f32 %v478, %v479
    %492 = vadd.xlane.f32.xlu0 %v491
    %v493 = vpop.xlane.xlu0 %492
    %v494 = vadd.f32 %v480, %v481
    %495 = vadd.xlane.f32.xlu0 %v494
    %v496 = vpop.xlane.xlu0 %495
    %497 = vxpose.xlu0.b32.start [1/16] %v484, 128
    %498 = vxpose.xlu0.b32.cont [2/16] %v487, 128
    %499 = vxpose.xlu0.b32.cont [3/16] %v490, 128
    %500 = vxpose.xlu0.b32.cont [4/16] %v493, 128
    %501 = vxpose.xlu0.b32.cont [5/16] %v496, 128
    %502 = vxpose.xlu0.b32.cont [6/16] 0.0, 128
    %503 = vxpose.xlu0.b32.cont [7/16] 0.0, 128
    %504 = vxpose.xlu0.b32.cont [8/16] 0.0, 128
    %505 = vxpose.xlu0.b32.cont [9/16] 0.0, 128
    %506 = vxpose.xlu0.b32.cont [10/16] 0.0, 128
    %507 = vxpose.xlu0.b32.cont [11/16] 0.0, 128
    %508 = vxpose.xlu0.b32.cont [12/16] 0.0, 128
    %509 = vxpose.xlu0.b32.cont [13/16] 0.0, 128
    %510 = vxpose.xlu0.b32.cont [14/16] 0.0, 128
    %511 = vxpose.xlu0.b32.cont [15/16] 0.0, 128
    %512 = vxpose.xlu0.b32.end [16/16] 0.0, 128
    %v513 = vpop.trf.xlu0
    %v514 = vpop.trf.xlu0
    %v515 = vpop.trf.xlu0
    %v516 = vpop.trf.xlu0
    %v517 = vpop.trf.xlu0
    %v518 = vpop.trf.xlu0
    %v519 = vpop.trf.xlu0
    %v520 = vpop.trf.xlu0
    %v521 = vpop.trf.xlu0
    %v522 = vpop.trf.xlu0
    %v523 = vpop.trf.xlu0
    %v524 = vpop.trf.xlu0
    %v525 = vpop.trf.xlu0
    %v526 = vpop.trf.xlu0
    %v527 = vpop.trf.xlu0
    %v528 = vpop.trf.xlu0
    %s529 = sld [smem:[#allocation2]]
    %v530 = vstv %s529
    %v531 = vadd.f32 %v513, %v530
    %v532 = vtanh.pop %v531
    %vm533 = vcmask 319488
    %534 = vst.msk [vmem:[#allocation6] sm:$0x1] %vm533, %v532
    // Predicated region
    $region34: #{tpu_custom_call.1} parent=1 // pred_check
      _
    $region35: #{tpu_custom_call.1} parent=1 // pred_check_branch
      %536 = sbr.rel (0) target = $region37
    $region36: #{tpu_custom_call.1} parent=1 // pred_region
      %s538 = ssub.s32 16, 16
      %539 = vsyncadd [#allocation5], %s538
      %s541 = sshll.u32 [#allocation6], 4
      %s542 = int_to_ptr.vmem [resolvable:$true] %s541
      %544 = dma.vmem_to_hbm [thread:$0]  %s542, 16, %s7, [#allocation5]
    $region37: #{tpu_custom_call.1} parent=1 // pred_fallthru
      _
    // Predicated region
    $region38: #{tpu_custom_call.1} parent=1 // pred_check
      _
    $region39: #{tpu_custom_call.1} parent=1 // pred_check_branch
      %546 = sbr.rel (0) target = $region41
    $region40: #{tpu_custom_call.1} parent=1 // pred_region
      %547 = dma.done [#allocation5], 16
    $region41: #{tpu_custom_call.1} parent=1 // pred_fallthru
      _
    %548 = vsyncpa [#allocation4], 1
    %549 = vsyncpa [#allocation5], 1

</llo_original>
